<compile_context>
chip_gen: v5e
topology: v5e:2x2
jax: 0.10.0
libtpu: 0.0.40
codegen_flags: <defaults>
</compile_context>

<pallas_src>
import functools

import jax
import jax.numpy as jnp
from jax.experimental import pallas as pl
from jax.experimental.pallas import tpu as pltpu


def _round_up(n, m):
    return ((n + m - 1) // m) * m


def _default_compute_dtype():
    """bf16 elementwise compute on bf16-capable VPU/EUP chips (v6e/v7x), f32 otherwise."""
    try:
        dk = jax.devices()[0].device_kind.lower()
    except Exception:
        return jnp.float32
    if ("v6" in dk) or ("v7" in dk) or ("tpu7" in dk):
        return jnp.bfloat16
    return jnp.float32          # v5e / v4: no bf16 VALU/EUP


# ----------------------------------------------------------------------------
# Fused backbone + heads kernel
# ----------------------------------------------------------------------------
def _backbone_heads_kernel(x_ref, wt_ref, b_ref, wh_ref, bh_ref,
                           feat_ref, logits_ref, acc_ref,
                           *, s_valid, pad_cnt, compute_dtype):
    """Grid = (B, num_s_tiles).

    x_ref     : [1, C, TILE_S]     one spatio-temporal tile of one sample (bf16/f32)
    wt_ref    : [F, C]             pointwise conv weight, transposed (f32)
    b_ref     : [F, 1]             conv bias (column)
    wh_ref    : [N_pad, F]         all heads' weights, concatenated + lane-padded, transposed
    bh_ref    : [N_pad, 1]         all heads' biases (column)
    feat_ref  : [1, F, 1]          features for this sample (resident across s)
    logits_ref: [1, N_pad, 1]      logits for this sample (resident across s)
    acc_ref   : [F, 1]             VMEM scratch: running f32 sum of swish(h) over S
    """
    s = pl.program_id(1)
    num_s = pl.num_programs(1)
    num_f, num_c = wt_ref.shape
    tile_s = x_ref.shape[2]
    n_pad = logits_ref.shape[1]

    @pl.when(s == 0)
    def _init():
        acc_ref[...] = jnp.zeros_like(acc_ref)

    def swish(v):
        # EUP exp; f32 path uses the approx EUP reciprocal (no VALU Newton refinement).
        e = jnp.exp(-v)
        if v.dtype == jnp.float32:
            return v * pl.reciprocal(1.0 + e, approx=True)
        return v / (1.0 + e)                                   # bf16 on v6e/v7x

    x = x_ref[0].astype(compute_dtype)                         # [C, TILE_S]
    wt = wt_ref[...].astype(compute_dtype)                     # [F, C]
    bias = b_ref[...].astype(compute_dtype)                    # [F, 1]

    # Pointwise (1x1x1) conv as C rank-1 broadcast FMAs on the VPU (K = C is tiny).
    # (MXU offload of this contraction is a measured v7x follow-up; see TODO above.)
    h = jnp.broadcast_to(bias, (num_f, tile_s))
    for c in range(num_c):                                     # static unroll, C is small
        h = h + wt[:, c:c + 1] * x[c:c + 1, :]                 # [F,1]*[1,TILE_S] -> [F,TILE_S]

    h = swish(h)

    # Partial global-average-pool: accumulate the f32 sum over this S tile.
    # NOTE: no per-element tail mask here -- padded columns contribute exactly swish(bias)
    # and are subtracted analytically in the finalize.
    acc_ref[...] += jnp.sum(h.astype(jnp.float32), axis=-1, keepdims=True)   # [F, 1]

    @pl.when(s == num_s - 1)
    def _finalize():
        acc = acc_ref[...]
        if pad_cnt:   # static python int: only emitted when S was padded
            acc = acc - pad_cnt * swish(bias).astype(jnp.float32)
        feat_col = acc * (1.0 / s_valid)                       # mean over S -> [F, 1]
        feat_ref[...] = feat_col.reshape(1, num_f, 1)
        # Fused classification heads: one matmul over the concatenated head weights,
        # computed while the features are still resident in VMEM.
        logits_col = (
            jnp.dot(wh_ref[...], feat_col, preferred_element_type=jnp.float32)
            + bh_ref[...]
        )                                                      # [N_pad, 1]
        logits_ref[...] = logits_col.reshape(1, n_pad, 1)


# ----------------------------------------------------------------------------
# Wrapper
# ----------------------------------------------------------------------------
@functools.partial(jax.jit, static_argnames=("max_tile_s", "compute_dtype"))
def _forward_impl(x_ncthw, wt, b_col, wh_t, bh_col, *, max_tile_s, compute_dtype):
    """x_ncthw: [B, C, T, H, W] -> (features [B, F], all-head logits [B, N_pad])."""
    B, C, T, H, W = x_ncthw.shape
    S = T * H * W
    F = wt.shape[0]
    N_pad = wh_t.shape[0]

    # NCTHW -> [B, C, S] is a pure reshape (last three axes contiguous): no HBM transpose.
    x = x_ncthw.reshape(B, C, S)

    # Tile the S axis.  Big tiles amortize the ~0.35us per-grid-step overhead; the cap is
    # derived from a VMEM temp budget so one formula is safe on v5e/v6e (128 MiB) and
    # v7x (64 MiB physical / 32 MiB scoped default).
    itemsize_c = jnp.dtype(compute_dtype).itemsize
    temp_budget = 18 * 1024 * 1024
    bytes_per_col = F * (3 * itemsize_c + 4) + 2 * C * x.dtype.itemsize
    vmem_cap = max(128, (temp_budget // bytes_per_col) // 128 * 128)
    tile_s = max(128, min(max_tile_s, vmem_cap, _round_up(S, 128)))

    num_s = pl.cdiv(S, tile_s)
    s_pad = num_s * tile_s
    pad_cnt = s_pad - S
    if pad_cnt:
        x = jnp.pad(x, ((0, 0), (0, 0), (0, pad_cnt)))

    kernel = functools.partial(_backbone_heads_kernel, s_valid=S, pad_cnt=pad_cnt,
                               compute_dtype=compute_dtype)

    feat3, logits3 = pl.pallas_call(
        kernel,
        out_shape=(
            jax.ShapeDtypeStruct((B, F, 1), jnp.float32),       # features
            jax.ShapeDtypeStruct((B, N_pad, 1), jnp.float32),   # logits (lane-padded heads)
        ),
        grid=(B, num_s),
        in_specs=[
            pl.BlockSpec((1, C, tile_s), lambda b, s: (b, 0, s)),   # x tile
            pl.BlockSpec((F, C), lambda b, s: (0, 0)),              # conv W^T (resident)
            pl.BlockSpec((F, 1), lambda b, s: (0, 0)),              # conv bias
            pl.BlockSpec((N_pad, F), lambda b, s: (0, 0)),          # heads W^T (resident)
            pl.BlockSpec((N_pad, 1), lambda b, s: (0, 0)),          # heads bias
        ],
        out_specs=(
            # Resident across s; last two block dims == full array dims (lane-legal).
            pl.BlockSpec((1, F, 1), lambda b, s: (b, 0, 0)),
            pl.BlockSpec((1, N_pad, 1), lambda b, s: (b, 0, 0)),
        ),
        scratch_shapes=[pltpu.VMEM((F, 1), jnp.float32)],           # f32 sum accumulator
        compiler_params=pltpu.CompilerParams(
            dimension_semantics=("parallel", "arbitrary"),          # B shardable (v7x 2 TCs)
            vmem_limit_bytes=32 * 1024 * 1024,
        ),
        cost_estimate=pl.CostEstimate(
            flops=2 * B * s_pad * C * F + 2 * B * F * N_pad,
            transcendentals=B * s_pad * F,
            bytes_accessed=B * C * s_pad * x.dtype.itemsize
            + (F * C + F + N_pad * F + N_pad) * 4
            + B * (F + N_pad) * 4,
        ),
    )(x, wt, b_col, wh_t, bh_col)

    # Free squeeze-reshapes (drop the trailing singleton) -- no XLA transposes.
    return feat3.reshape(B, F), logits3.reshape(B, N_pad)


class BaseModelPallas:
    """JAX/Pallas analogue of BaseModel (forward path only)."""

    def __init__(self, backbone="movinetA0", dataset="synthetic",
                 in_channels=3, feature_space_size=32, seed=0,
                 max_tile_s=32768, compute_dtype=None):
        assert backbone in ("movinetA0", "movinetA1", "movinetA2")
        self.backbone_type = backbone
        self.dataset = dataset
        self.feature_space_size = feature_space_size
        self.max_tile_s = max_tile_s
        self.compute_dtype = (_default_compute_dtype()
                              if compute_dtype is None else compute_dtype)

        key = jax.random.PRNGKey(seed)
        kw, kb = jax.random.split(key)
        F, C = feature_space_size, in_channels
        self.backbone_wt = (jax.random.normal(kw, (F, C), jnp.float32)
                            / jnp.sqrt(C))                     # W^T  [F, C]
        self.backbone_b = jax.random.normal(kb, (F, 1), jnp.float32) * 0.01
        self.heads = []                                        # list of (w [F, n], b [n])
        self._head_seed = 1000

    def get_feat_size(self):
        return self.feature_space_size

    def add_classification_head(self, n_out):
        key = jax.random.PRNGKey(self._head_seed)
        self._head_seed += 1
        kw, kb = jax.random.split(key)
        F = self.feature_space_size
        w = jax.random.normal(kw, (F, n_out), jnp.float32) / jnp.sqrt(F)
        b = jax.random.normal(kb, (n_out,), jnp.float32) * 0.01
        self.heads.append((w, b))

    def _packed_heads(self):
        """Concatenate all head params, transpose, pad outputs to a 128-lane multiple."""
        F = self.feature_space_size
        n_total = sum(w.shape[1] for w, _ in self.heads)
        n_pad = _round_up(max(n_total, 1), 128)
        wh_t = jnp.zeros((n_pad, F), jnp.float32)
        bh = jnp.zeros((n_pad, 1), jnp.float32)
        off = 0
        for w, b in self.heads:
            n = w.shape[1]
            wh_t = wh_t.at[off:off + n, :].set(w.T)
            bh = bh.at[off:off + n, 0].set(b)
            off += n
        return wh_t, bh

    def forward(self, x):
        wh_t, bh = self._packed_heads()
        features, logits_all = _forward_impl(
            x, self.backbone_wt, self.backbone_b, wh_t, bh,
            max_tile_s=self.max_tile_s, compute_dtype=self.compute_dtype)
        results = {}
        off = 0
        for hid, (w, _) in enumerate(self.heads):
            n = w.shape[1]
            results[hid] = logits_all[:, off:off + n]   # [B, n] == head(features).flatten(1)
            off += n
        return results, features

    __call__ = forward


# ----------------------------------------------------------------------------
# Main
# ----------------------------------------------------------------------------
if __name__ == "__main__":
    key = jax.random.PRNGKey(0)
    # Small NCTHW video batch; H = W = 13 makes S = 676 (not a multiple of 128) so the
    # analytic padding correction is exercised.
    B, C, T, H, W = 2, 3, 4, 13, 13
    # Feed the kernel bf16 video (halves HBM traffic); accumulation stays f32 in-kernel.
    x = jax.random.normal(key, (B, C, T, H, W), jnp.float32).astype(jnp.bfloat16)

    model = BaseModelPallas(backbone="movinetA0", dataset="synthetic",
                            in_channels=C, feature_space_size=32, seed=0)
    # Production default is max_tile_s=32768 (amortizes grid-step overhead); shrink only
    # here so the toy-sized test exercises the multi-tile accumulation path (3 S-tiles).
    model.max_tile_s = 256
    model.add_classification_head(n_out=8)     # task 0
    model.add_classification_head(n_out=16)    # task 1

    results, features = model(x)
    jax.block_until_ready(features)
    for v in results.values():
        jax.block_until_ready(v)

    # sanity: reference in plain JAX (f32, exact sigmoid)
    S = T * H * W
    xf = x.astype(jnp.float32).reshape(B, C, S)
    h = jnp.einsum("fc,bcs->bfs", model.backbone_wt, xf) + model.backbone_b
    h = h * jax.nn.sigmoid(h)
    feat_ref = jnp.mean(h, axis=-1)                     # [B, F]
    tol = 3e-2 if model.compute_dtype == jnp.bfloat16 else 5e-3
    assert features.shape == (B, model.feature_space_size)
    assert jnp.allclose(features, feat_ref, atol=tol, rtol=tol)
    for hid, (w, b) in enumerate(model.heads):
        ref = feat_ref @ w + b
        assert results[hid].shape == (B, w.shape[1])
        assert jnp.allclose(results[hid], ref, atol=tol, rtol=tol)

    print("KERNEL_OK")
</pallas_src>

<mosaic_0001>
module attributes {stable_mosaic.version = 11 : i64} {
  func.func @_backbone_heads_kernel(%arg0: i32, %arg1: i32, %arg2: memref<1x3x256xbf16, #tpu.memory_space<vmem>>, %arg3: memref<32x3xf32, #tpu.memory_space<vmem>>, %arg4: memref<32x1xf32, #tpu.memory_space<vmem>>, %arg5: memref<128x32xf32, #tpu.memory_space<vmem>>, %arg6: memref<128x1xf32, #tpu.memory_space<vmem>>, %arg7: memref<1x32x1xf32, #tpu.memory_space<vmem>>, %arg8: memref<1x128x1xf32, #tpu.memory_space<vmem>>, %arg9: memref<32x1xf32, #tpu.memory_space<vmem>>) attributes {dimension_semantics = [#tpu.dimension_semantics<parallel>, #tpu.dimension_semantics<arbitrary>], iteration_bounds = array<i64: 2, 3>, scalar_prefetch = 0 : i64, scratch_operands = 1 : i64, tpu.core_type = #tpu.core_type<tc>, window_params = [{transform_indices = @transform_0, window_bounds = array<i64: 1, 3, 256>}, {pipeline_mode = #tpu.pipeline_mode<synchronous>, transform_indices = @transform_1, window_bounds = array<i64: 32, 3>}, {pipeline_mode = #tpu.pipeline_mode<synchronous>, transform_indices = @transform_2, window_bounds = array<i64: 32, 1>}, {pipeline_mode = #tpu.pipeline_mode<synchronous>, transform_indices = @transform_3, window_bounds = array<i64: 128, 32>}, {pipeline_mode = #tpu.pipeline_mode<synchronous>, transform_indices = @transform_4, window_bounds = array<i64: 128, 1>}, {transform_indices = @transform_5, window_bounds = array<i64: 1, 32, 1>}, {transform_indices = @transform_6, window_bounds = array<i64: 1, 128, 1>}]} {
    %c0_i32 = arith.constant 0 : i32
    %0 = arith.cmpi eq, %arg1, %c0_i32 : i32
    %1 = arith.extui %0 : i1 to i32
    %c0_i32_0 = arith.constant 0 : i32
    %2 = arith.cmpi ne, %1, %c0_i32_0 : i32
    scf.if %2 {
      %cst_14 = arith.constant 0.000000e+00 : f32
      %43 = vector.broadcast %cst_14 : f32 to vector<32x1xf32>
      %c0_15 = arith.constant 0 : index
      %c0_16 = arith.constant 0 : index
      %44 = vector.load %arg9[%c0_15, %c0_16] : memref<32x1xf32, #tpu.memory_space<vmem>>, vector<32x1xf32>
      tpu.vector_store %arg9[%c0_15, %c0_16], %43 {strides = array<i32>} : memref<32x1xf32, #tpu.memory_space<vmem>>, vector<32x1xf32>,
    } else {
    }
    %c0 = arith.constant 0 : index
    %c0_1 = arith.constant 0 : index
    %c0_2 = arith.constant 0 : index
    %3 = vector.load %arg2[%c0, %c0_1, %c0_2] : memref<1x3x256xbf16, #tpu.memory_space<vmem>>, vector<1x3x256xbf16>
    %4 = vector.shape_cast %3 : vector<1x3x256xbf16> to vector<3x256xbf16>
    %5 = arith.extf %4 : vector<3x256xbf16> to vector<3x256xf32>
    %c0_3 = arith.constant 0 : index
    %c0_4 = arith.constant 0 : index
    %6 = vector.load %arg3[%c0_3, %c0_4] : memref<32x3xf32, #tpu.memory_space<vmem>>, vector<32x3xf32>
    %c0_5 = arith.constant 0 : index
    %c0_6 = arith.constant 0 : index
    %7 = vector.load %arg4[%c0_5, %c0_6] : memref<32x1xf32, #tpu.memory_space<vmem>>, vector<32x1xf32>
    %8 = vector.shape_cast %7 : vector<32x1xf32> to vector<32x1xf32>
    %9 = vector.broadcast %8 : vector<32x1xf32> to vector<32x256xf32>
    %10 = vector.extract_strided_slice %6 {offsets = [0, 0], sizes = [32, 1], strides = [1, 1]} : vector<32x3xf32> to vector<32x1xf32>
    %11 = vector.extract_strided_slice %5 {offsets = [0, 0], sizes = [1, 256], strides = [1, 1]} : vector<3x256xf32> to vector<1x256xf32>
    %12 = vector.broadcast %10 : vector<32x1xf32> to vector<32x256xf32>
    %13 = vector.broadcast %11 : vector<1x256xf32> to vector<32x256xf32>
    %14 = arith.mulf %12, %13 : vector<32x256xf32>
    %15 = arith.addf %9, %14 : vector<32x256xf32>
    %16 = vector.extract_strided_slice %6 {offsets = [0, 1], sizes = [32, 1], strides = [1, 1]} : vector<32x3xf32> to vector<32x1xf32>
    %17 = vector.extract_strided_slice %5 {offsets = [1, 0], sizes = [1, 256], strides = [1, 1]} : vector<3x256xf32> to vector<1x256xf32>
    %18 = vector.broadcast %16 : vector<32x1xf32> to vector<32x256xf32>
    %19 = vector.broadcast %17 : vector<1x256xf32> to vector<32x256xf32>
    %20 = arith.mulf %18, %19 : vector<32x256xf32>
    %21 = arith.addf %15, %20 : vector<32x256xf32>
    %22 = vector.extract_strided_slice %6 {offsets = [0, 2], sizes = [32, 1], strides = [1, 1]} : vector<32x3xf32> to vector<32x1xf32>
    %23 = vector.extract_strided_slice %5 {offsets = [2, 0], sizes = [1, 256], strides = [1, 1]} : vector<3x256xf32> to vector<1x256xf32>
    %24 = vector.broadcast %22 : vector<32x1xf32> to vector<32x256xf32>
    %25 = vector.broadcast %23 : vector<1x256xf32> to vector<32x256xf32>
    %26 = arith.mulf %24, %25 : vector<32x256xf32>
    %27 = arith.addf %21, %26 : vector<32x256xf32>
    %cst = arith.constant 0.000000e+00 : f32
    %28 = vector.broadcast %cst : f32 to vector<32x256xf32>
    %29 = arith.subf %28, %27 : vector<32x256xf32>
    %30 = math.exp %29 : vector<32x256xf32>
    %cst_7 = arith.constant 1.000000e+00 : f32
    %31 = vector.broadcast %cst_7 : f32 to vector<32x256xf32>
    %32 = arith.addf %31, %30 : vector<32x256xf32>
    %33 = tpu.reciprocal %32 {approx = true} : vector<32x256xf32> -> vector<32x256xf32>
    %34 = arith.mulf %27, %33 : vector<32x256xf32>
    %c0_8 = arith.constant 0 : index
    %c0_9 = arith.constant 0 : index
    %35 = vector.load %arg9[%c0_8, %c0_9] : memref<32x1xf32, #tpu.memory_space<vmem>>, vector<32x1xf32>
    %cst_10 = arith.constant dense<0.000000e+00> : vector<32xf32>
    %36 = vector.multi_reduction <add>, %34, %cst_10 [1] : vector<32x256xf32> to vector<32xf32>
    %37 = vector.shape_cast %36 : vector<32xf32> to vector<32x1xf32>
    %38 = arith.addf %35, %37 : vector<32x1xf32>
    %c0_11 = arith.constant 0 : index
    %c0_12 = arith.constant 0 : index
    %39 = vector.load %arg9[%c0_11, %c0_12] : memref<32x1xf32, #tpu.memory_space<vmem>>, vector<32x1xf32>
    tpu.vector_store %arg9[%c0_11, %c0_12], %38 {strides = array<i32>} : memref<32x1xf32, #tpu.memory_space<vmem>>, vector<32x1xf32>,
    %c2_i32 = arith.constant 2 : i32
    %40 = arith.cmpi eq, %arg1, %c2_i32 : i32
    %41 = arith.extui %40 : i1 to i32
    %c0_i32_13 = arith.constant 0 : i32
    %42 = arith.cmpi ne, %41, %c0_i32_13 : i32
    scf.if %42 {
      %c0_14 = arith.constant 0 : index
      %c0_15 = arith.constant 0 : index
      %43 = vector.load %arg9[%c0_14, %c0_15] : memref<32x1xf32, #tpu.memory_space<vmem>>, vector<32x1xf32>
      %cst_16 = arith.constant 0.000000e+00 : f32
      %44 = vector.broadcast %cst_16 : f32 to vector<32x1xf32>
      %45 = arith.subf %44, %7 : vector<32x1xf32>
      %46 = math.exp %45 : vector<32x1xf32>
      %cst_17 = arith.constant 1.000000e+00 : f32
      %47 = vector.broadcast %cst_17 : f32 to vector<32x1xf32>
      %48 = arith.addf %47, %46 : vector<32x1xf32>
      %49 = tpu.reciprocal %48 {approx = true} : vector<32x1xf32> -> vector<32x1xf32>
      %50 = arith.mulf %7, %49 : vector<32x1xf32>
      %cst_18 = arith.constant 9.200000e+01 : f32
      %51 = vector.broadcast %cst_18 : f32 to vector<32x1xf32>
      %52 = arith.mulf %51, %50 : vector<32x1xf32>
      %53 = arith.subf %43, %52 : vector<32x1xf32>
      %cst_19 = arith.constant 1.479290e-03 : f32
      %54 = vector.broadcast %cst_19 : f32 to vector<32x1xf32>
      %55 = arith.mulf %53, %54 : vector<32x1xf32>
      %56 = vector.shape_cast %55 : vector<32x1xf32> to vector<1x32x1xf32>
      %c0_20 = arith.constant 0 : index
      %c0_21 = arith.constant 0 : index
      %c0_22 = arith.constant 0 : index
      %57 = vector.load %arg7[%c0_20, %c0_21, %c0_22] : memref<1x32x1xf32, #tpu.memory_space<vmem>>, vector<1x32x1xf32>
      tpu.vector_store %arg7[%c0_20, %c0_21, %c0_22], %56 {strides = array<i32>} : memref<1x32x1xf32, #tpu.memory_space<vmem>>, vector<1x32x1xf32>,
      %c0_23 = arith.constant 0 : index
      %c0_24 = arith.constant 0 : index
      %58 = vector.load %arg5[%c0_23, %c0_24] : memref<128x32xf32, #tpu.memory_space<vmem>>, vector<128x32xf32>
      %cst_25 = arith.constant dense<0.000000e+00> : vector<128x1xf32>
      %59 = tpu.matmul %58, %55, %cst_25 {dimension_numbers = #tpu.dot_dimension_numbers<[1], [0], [0], [1], [0, 0, 1, 1], [], []>} : vector<128x32xf32>, vector<32x1xf32>, vector<128x1xf32> -> vector<128x1xf32>
      %c0_26 = arith.constant 0 : index
      %c0_27 = arith.constant 0 : index
      %60 = vector.load %arg6[%c0_26, %c0_27] : memref<128x1xf32, #tpu.memory_space<vmem>>, vector<128x1xf32>
      %61 = arith.addf %59, %60 : vector<128x1xf32>
      %62 = vector.shape_cast %61 : vector<128x1xf32> to vector<1x128x1xf32>
      %c0_28 = arith.constant 0 : index
      %c0_29 = arith.constant 0 : index
      %c0_30 = arith.constant 0 : index
      %63 = vector.load %arg8[%c0_28, %c0_29, %c0_30] : memref<1x128x1xf32, #tpu.memory_space<vmem>>, vector<1x128x1xf32>
      tpu.vector_store %arg8[%c0_28, %c0_29, %c0_30], %62 {strides = array<i32>} : memref<1x128x1xf32, #tpu.memory_space<vmem>>, vector<1x128x1xf32>,
    } else {
    }
    return
  }
  func.func @transform_0(%arg0: i32, %arg1: i32) -> (i32, i32, i32) {
    %c0_i32 = arith.constant 0 : i32
    %c0_i32_0 = arith.constant 0 : i32
    return %arg0, %c0_i32, %arg1 : i32, i32, i32
  }
  func.func @transform_1(%arg0: i32, %arg1: i32) -> (i32, i32) {
    %c0_i32 = arith.constant 0 : i32
    %c0_i32_0 = arith.constant 0 : i32
    %c0_i32_1 = arith.constant 0 : i32
    return %c0_i32, %c0_i32_0 : i32, i32
  }
  func.func @transform_2(%arg0: i32, %arg1: i32) -> (i32, i32) {
    %c0_i32 = arith.constant 0 : i32
    %c0_i32_0 = arith.constant 0 : i32
    %c0_i32_1 = arith.constant 0 : i32
    return %c0_i32, %c0_i32_0 : i32, i32
  }
  func.func @transform_3(%arg0: i32, %arg1: i32) -> (i32, i32) {
    %c0_i32 = arith.constant 0 : i32
    %c0_i32_0 = arith.constant 0 : i32
    %c0_i32_1 = arith.constant 0 : i32
    return %c0_i32, %c0_i32_0 : i32, i32
  }
  func.func @transform_4(%arg0: i32, %arg1: i32) -> (i32, i32) {
    %c0_i32 = arith.constant 0 : i32
    %c0_i32_0 = arith.constant 0 : i32
    %c0_i32_1 = arith.constant 0 : i32
    return %c0_i32, %c0_i32_0 : i32, i32
  }
  func.func @transform_5(%arg0: i32, %arg1: i32) -> (i32, i32, i32) {
    %c0_i32 = arith.constant 0 : i32
    %c0_i32_0 = arith.constant 0 : i32
    %c0_i32_1 = arith.constant 0 : i32
    return %arg0, %c0_i32, %c0_i32_0 : i32, i32, i32
  }
  func.func @transform_6(%arg0: i32, %arg1: i32) -> (i32, i32, i32) {
    %c0_i32 = arith.constant 0 : i32
    %c0_i32_0 = arith.constant 0 : i32
    %c0_i32_1 = arith.constant 0 : i32
    return %arg0, %c0_i32, %c0_i32_0 : i32, i32, i32
  }
}

</mosaic_0001>

<llo_original>
// kernel: _forward_impl.1
$region0: #{_forward_impl.1}
  #allocation0 [shape = 'u32[]', space=smem, size = 0x4, offset = 0x4, fixed_abs, tag = 'smem constant byte address 0x4 - core index']
  #allocation1 [shape = 'u32[72,128]{1,0:T(1,128)}', space=vmem, size = 0x9000, scoped, tag = 'internal scratch']
  #allocation2 [shape = 'f32[32,1]{1,0:T(8,128)}', space=vmem, size = 0x4000, scoped, tag = 'scratch operand']
  %s0 = inlined_call_operand.vmem [shape: bf16[2,3,768], index: 0, kind: input, shape index: {}]
  %s1 = inlined_call_operand.vmem [shape: f32[32,3], index: 1, kind: input, shape index: {}]
  %s2 = inlined_call_operand.vmem [shape: f32[32,1], index: 2, kind: input, shape index: {}]
  %s3 = inlined_call_operand.vmem [shape: f32[128,32], index: 3, kind: input, shape index: {}]
  %s4 = inlined_call_operand.vmem [shape: f32[128,1], index: 4, kind: input, shape index: {}]
  %s5 = inlined_call_operand.vmem [shape: f32[2,32,1], index: 5, kind: output, shape index: {0}]
  %s6 = inlined_call_operand.vmem [shape: f32[2,128,1], index: 6, kind: output, shape index: {1}]
  %7 = xla_tuple %s5, %s6
  %s8 = sld [smem:[#allocation0]]
  $region69: #{_forward_impl.1} parent=0
    _
  %s10 = ssub.s32 1, %s8
  %s11 = scalar_select 0, %s10, %s8
  loop: start=0, step=1, limit=8
  $region2: #{_forward_impl.1} parent=0 // loop_pre_header
    _
  $region3: #{_forward_impl.1} parent=0 // loop_header
    %s13 = sphi 0, %s17
    %p14 = scmp.ge.s32.totalorder %s13, 8
    %s20 = sphi 0, %s32
    %s21 = sphi 0, %s28
    %s22 = sphi 0, %s20
    %s23 = sphi 0, %s21
    %s24 = sphi 0, %s22
    %s25 = sphi 0, %s23
    %s37 = sphi 0, %s39
    %s40 = sphi 0, %s37
    %s41 = sphi 0, %s40
    %s57 = sphi 0, %s41
    %s61 = sphi 0, %s61
    %s63 = sphi 0, %s61
    %s64 = sphi 0, %s63
    %s78 = sphi 0, %s64
    %s82 = sphi 0, %s82
    %s84 = sphi 0, %s82
    %s85 = sphi 0, %s84
    %s99 = sphi 0, %s85
    %s103 = sphi 0, %s103
    %s105 = sphi 0, %s103
    %s106 = sphi 0, %s105
    %s120 = sphi 0, %s106
    %s124 = sphi 0, %s124
    %s126 = sphi 0, %s124
    %s127 = sphi 0, %s126
    %s141 = sphi 0, %s127
    %s147 = sphi 0, %s149
    %s150 = sphi 0, %s147
    %s151 = sphi 0, %s150
    %s167 = sphi 0, %s151
    %s173 = sphi 0, %s175
    %s176 = sphi 0, %s173
    %s177 = sphi 0, %s176
    %s193 = sphi 0, %s177
  $region4: #{_forward_impl.1} parent=0 // loop_header_branch
    %16 = sbr.rel (%p14) target = $region8
  $region5: #{_forward_impl.1} parent=0 // loop_body
    %s18 = ssub.s32 %s13, 1
    %s19 = ssub.s32 %s13, 2
    %s26 = sadd.s32 1, %s21
    %p27 = scmp.ge.s32.totalorder %s26, 3
    %s28 = scalar_select %p27, 0, %s26
    %s29 = sadd.s32 1, %s20
    %s30 = scalar_select %p27, %s29, %s20
    %p31 = scmp.ge.s32.totalorder %s30, 2
    %s32 = scalar_select %p31, 0, %s30
    %s33 = ssub.s32 %s20, %s32
    %s34 = ssub.s32 %s21, %s28
    %s35 = sor.u32 %s33, %s34
    %p36 = scmp.eq.s32.totalorder %s35, 0
    %s38 = sadd.s32 %s37, 1
    %s39 = scalar_select %p36, %s37, %s38
    %p42 = pneg %p36
    %p43 = scmp.eq.s32.totalorder %s13, 5
    %p44 = por %p42, %p43
    %p45 = scmp.ne.s32.totalorder %s37, %s40
    %p46 = scmp.eq.s32.totalorder %s13, 0
    %p47 = por %p45, %p46
    %p48 = scmp.ne.s32.totalorder %s37, %s40
    %p49 = scmp.eq.s32.totalorder %s18, 5
    %p50 = por %p48, %p49
    %p51 = scmp.ne.s32.totalorder %s40, %s41
    %p52 = scmp.eq.s32.totalorder %s18, 0
    %p53 = por %p51, %p52
    %p54 = scmp.ne.s32.totalorder %s40, %s41
    %p55 = scmp.eq.s32.totalorder %s19, 5
    %p56 = por %p54, %p55
    %p58 = scmp.ne.s32.totalorder %s41, %s57
    %p59 = scmp.eq.s32.totalorder %s19, 0
    %p60 = por %p58, %p59
    %s62 = sadd.s32 %s61, 1
    %p65 = scmp.eq.s32.totalorder %s13, 5
    %p66 = scmp.ne.s32.totalorder %s61, %s63
    %p67 = scmp.eq.s32.totalorder %s13, 0
    %p68 = por %p66, %p67
    %p69 = scmp.ne.s32.totalorder %s61, %s63
    %p70 = scmp.eq.s32.totalorder %s18, 5
    %p71 = por %p69, %p70
    %p72 = scmp.ne.s32.totalorder %s63, %s64
    %p73 = scmp.eq.s32.totalorder %s18, 0
    %p74 = por %p72, %p73
    %p75 = scmp.ne.s32.totalorder %s63, %s64
    %p76 = scmp.eq.s32.totalorder %s19, 5
    %p77 = por %p75, %p76
    %p79 = scmp.ne.s32.totalorder %s64, %s78
    %p80 = scmp.eq.s32.totalorder %s19, 0
    %p81 = por %p79, %p80
    %s83 = sadd.s32 %s82, 1
    %p86 = scmp.eq.s32.totalorder %s13, 5
    %p87 = scmp.ne.s32.totalorder %s82, %s84
    %p88 = scmp.eq.s32.totalorder %s13, 0
    %p89 = por %p87, %p88
    %p90 = scmp.ne.s32.totalorder %s82, %s84
    %p91 = scmp.eq.s32.totalorder %s18, 5
    %p92 = por %p90, %p91
    %p93 = scmp.ne.s32.totalorder %s84, %s85
    %p94 = scmp.eq.s32.totalorder %s18, 0
    %p95 = por %p93, %p94
    %p96 = scmp.ne.s32.totalorder %s84, %s85
    %p97 = scmp.eq.s32.totalorder %s19, 5
    %p98 = por %p96, %p97
    %p100 = scmp.ne.s32.totalorder %s85, %s99
    %p101 = scmp.eq.s32.totalorder %s19, 0
    %p102 = por %p100, %p101
    %s104 = sadd.s32 %s103, 1
    %p107 = scmp.eq.s32.totalorder %s13, 5
    %p108 = scmp.ne.s32.totalorder %s103, %s105
    %p109 = scmp.eq.s32.totalorder %s13, 0
    %p110 = por %p108, %p109
    %p111 = scmp.ne.s32.totalorder %s103, %s105
    %p112 = scmp.eq.s32.totalorder %s18, 5
    %p113 = por %p111, %p112
    %p114 = scmp.ne.s32.totalorder %s105, %s106
    %p115 = scmp.eq.s32.totalorder %s18, 0
    %p116 = por %p114, %p115
    %p117 = scmp.ne.s32.totalorder %s105, %s106
    %p118 = scmp.eq.s32.totalorder %s19, 5
    %p119 = por %p117, %p118
    %p121 = scmp.ne.s32.totalorder %s106, %s120
    %p122 = scmp.eq.s32.totalorder %s19, 0
    %p123 = por %p121, %p122
    %s125 = sadd.s32 %s124, 1
    %p128 = scmp.eq.s32.totalorder %s13, 5
    %p129 = scmp.ne.s32.totalorder %s124, %s126
    %p130 = scmp.eq.s32.totalorder %s13, 0
    %p131 = por %p129, %p130
    %p132 = scmp.ne.s32.totalorder %s124, %s126
    %p133 = scmp.eq.s32.totalorder %s18, 5
    %p134 = por %p132, %p133
    %p135 = scmp.ne.s32.totalorder %s126, %s127
    %p136 = scmp.eq.s32.totalorder %s18, 0
    %p137 = por %p135, %p136
    %p138 = scmp.ne.s32.totalorder %s126, %s127
    %p139 = scmp.eq.s32.totalorder %s19, 5
    %p140 = por %p138, %p139
    %p142 = scmp.ne.s32.totalorder %s127, %s141
    %p143 = scmp.eq.s32.totalorder %s19, 0
    %p144 = por %p142, %p143
    %s145 = ssub.s32 %s20, %s32
    %p146 = scmp.eq.s32.totalorder %s145, 0
    %s148 = sadd.s32 %s147, 1
    %s149 = scalar_select %p146, %s147, %s148
    %p152 = pneg %p146
    %p153 = scmp.eq.s32.totalorder %s13, 5
    %p154 = por %p152, %p153
    %p155 = scmp.ne.s32.totalorder %s147, %s150
    %p156 = scmp.eq.s32.totalorder %s13, 0
    %p157 = por %p155, %p156
    %p158 = scmp.ne.s32.totalorder %s147, %s150
    %p159 = scmp.eq.s32.totalorder %s18, 5
    %p160 = por %p158, %p159
    %p161 = scmp.ne.s32.totalorder %s150, %s151
    %p162 = scmp.eq.s32.totalorder %s18, 0
    %p163 = por %p161, %p162
    %p164 = scmp.ne.s32.totalorder %s150, %s151
    %p165 = scmp.eq.s32.totalorder %s19, 5
    %p166 = por %p164, %p165
    %p168 = scmp.ne.s32.totalorder %s151, %s167
    %p169 = scmp.eq.s32.totalorder %s19, 0
    %p170 = por %p168, %p169
    %s171 = ssub.s32 %s20, %s32
    %p172 = scmp.eq.s32.totalorder %s171, 0
    %s174 = sadd.s32 %s173, 1
    %s175 = scalar_select %p172, %s173, %s174
    %p178 = pneg %p172
    %p179 = scmp.eq.s32.totalorder %s13, 5
    %p180 = por %p178, %p179
    %p181 = scmp.ne.s32.totalorder %s173, %s176
    %p182 = scmp.eq.s32.totalorder %s13, 0
    %p183 = por %p181, %p182
    %p184 = scmp.ne.s32.totalorder %s173, %s176
    %p185 = scmp.eq.s32.totalorder %s18, 5
    %p186 = por %p184, %p185
    %p187 = scmp.ne.s32.totalorder %s176, %s177
    %p188 = scmp.eq.s32.totalorder %s18, 0
    %p189 = por %p187, %p188
    %p190 = scmp.ne.s32.totalorder %s176, %s177
    %p191 = scmp.eq.s32.totalorder %s19, 5
    %p192 = por %p190, %p191
    %p194 = scmp.ne.s32.totalorder %s177, %s193
    %p195 = scmp.eq.s32.totalorder %s19, 0
    %p196 = por %p194, %p195
    %p197 = scmp.le.s32.totalorder 1, %s13
    %p198 = scmp.lt.s32.totalorder %s13, 7
    %p199 = pnand %p197, %p198
    %p200 = pneg %p199
    // Predicated region
    $region9: #{_forward_impl.1} parent=5 // pred_check
      _
    $region10: #{_forward_impl.1} parent=5 // pred_check_branch
      %202 = sbr.rel (%p199) target = $region12
    $region11: #{_forward_impl.1} parent=5 // pred_region
      %s203 = ssub.s32 %s13, 1
      // Predicated region
      $region13: #{_forward_impl.1} parent=11 // pred_check
        %p204 = pneg %p74
      $region14: #{_forward_impl.1} parent=11 // pred_check_branch
        %206 = sbr.rel (%p204) target = $region16
      $region15: #{_forward_impl.1} parent=11 // pred_region
        _
      $region16: #{_forward_impl.1} parent=11 // pred_fallthru
        _
      // Predicated region
      $region17: #{_forward_impl.1} parent=11 // pred_check
        %p207 = pneg %p95
      $region18: #{_forward_impl.1} parent=11 // pred_check_branch
        %209 = sbr.rel (%p207) target = $region20
      $region19: #{_forward_impl.1} parent=11 // pred_region
        _
      $region20: #{_forward_impl.1} parent=11 // pred_fallthru
        _
      // Predicated region
      $region21: #{_forward_impl.1} parent=11 // pred_check
        %p210 = pneg %p116
      $region22: #{_forward_impl.1} parent=11 // pred_check_branch
        %212 = sbr.rel (%p210) target = $region24
      $region23: #{_forward_impl.1} parent=11 // pred_region
        _
      $region24: #{_forward_impl.1} parent=11 // pred_fallthru
        _
      // Predicated region
      $region25: #{_forward_impl.1} parent=11 // pred_check
        %p213 = pneg %p137
      $region26: #{_forward_impl.1} parent=11 // pred_check_branch
        %215 = sbr.rel (%p213) target = $region28
      $region27: #{_forward_impl.1} parent=11 // pred_region
        _
      $region28: #{_forward_impl.1} parent=11 // pred_fallthru
        _
    $region12: #{_forward_impl.1} parent=5 // pred_fallthru
      _
    %p216 = scmp.lt.s32.totalorder %s13, 6
    // Predicated region
    $region29: #{_forward_impl.1} parent=5 // pred_check
      %p217 = pneg %p216
    $region30: #{_forward_impl.1} parent=5 // pred_check_branch
      %219 = sbr.rel (%p217) target = $region32
    $region31: #{_forward_impl.1} parent=5 // pred_region
      // Predicated region
      $region33: #{_forward_impl.1} parent=31 // pred_check
        %p220 = pneg %p47
      $region34: #{_forward_impl.1} parent=31 // pred_check_branch
        %222 = sbr.rel (%p220) target = $region36
      $region35: #{_forward_impl.1} parent=31 // pred_region
        %s223 = smul.u32 2, %s21
        %p224 = scmp.lt.s32.totalorder %s20, 1
        %s225 = scalar_select %p224, %s20, 1
        %p226 = scmp.lt.s32.totalorder %s223, 5
        %s227 = scalar_select %p226, %s223, 5
        %s228 = smul.addr %s225, 6
        %s229 = sadd.s32 %s227, %s228
        %s230 = smul.addr %s229, 2
        %s231 = scalar_lea.vmem %s0, %s230
        %s232 = smul.u32 2, %s21
      $region36: #{_forward_impl.1} parent=31 // pred_fallthru
        _
    $region32: #{_forward_impl.1} parent=5 // pred_fallthru
      _
    %p233 = scmp.le.s32.totalorder 1, %s13
    %p234 = scmp.lt.s32.totalorder %s13, 7
    %p235 = pnand %p233, %p234
    %p236 = pneg %p235
    // Predicated region
    $region37: #{_forward_impl.1} parent=5 // pred_check
      _
    $region38: #{_forward_impl.1} parent=5 // pred_check_branch
      %238 = sbr.rel (%p235) target = $region40
    $region39: #{_forward_impl.1} parent=5 // pred_region
      %s239 = ssub.s32 %s13, 1
      %s240 = smul.u32 2, %s23
      %p241 = scmp.lt.s32.totalorder %s22, 1
      %s242 = scalar_select %p241, %s22, 1
      %p243 = scmp.lt.s32.totalorder %s240, 5
      %s244 = scalar_select %p243, %s240, 5
      %s245 = smul.addr %s242, 6
      %s246 = sadd.s32 %s244, %s245
      %s247 = smul.addr %s246, 2
      %s248 = scalar_lea.vmem %s0, %s247
      %p249 = pneg %p53
      %p250 = pneg %p50
      %p251 = pneg %p74
      %p252 = pneg %p71
      %p253 = pneg %p95
      %p254 = pneg %p92
      %p255 = pneg %p116
      %p256 = pneg %p113
      %p257 = pneg %p137
      %p258 = pneg %p134
      %p259 = pneg %p163
      %p260 = pneg %p160
      %p261 = scmp.lt.s32.totalorder %s22, 1
      %s262 = scalar_select %p261, %s22, 1
      %s263 = smul.addr %s262, 4
      %s264 = smul.addr %s263, 8
      %s265 = scalar_lea.vmem %s5, %s264
      %p266 = pneg %p189
      %p267 = pneg %p186
      %p268 = scmp.lt.s32.totalorder %s22, 1
      %s269 = scalar_select %p268, %s22, 1
      %s270 = smul.addr %s269, 16
      %s271 = smul.addr %s270, 8
      %s272 = scalar_lea.vmem %s6, %s271
      %s273 = smul.u32 2, %s23
      %p274 = scmp.lt.s32.totalorder %s22, 1
      %s275 = scalar_select %p274, %s22, 1
      %p276 = scmp.lt.s32.totalorder %s273, 5
      %s277 = scalar_select %p276, %s273, 5
      %s278 = smul.addr %s275, 6
      %s279 = sadd.s32 %s277, %s278
      %s280 = smul.addr %s279, 2
      %s281 = scalar_lea.vmem %s0, %s280
      %s282 = smul.u32 2, %s23
      %p283 = scmp.lt.s32.totalorder %s22, 1
      %s284 = scalar_select %p283, %s22, 1
      %s285 = smul.addr %s284, 4
      %s286 = smul.addr %s285, 8
      %s287 = scalar_lea.vmem %s5, %s286
      %p288 = scmp.lt.s32.totalorder %s22, 1
      %s289 = scalar_select %p288, %s22, 1
      %s290 = smul.addr %s289, 16
      %s291 = smul.addr %s290, 8
      %s292 = scalar_lea.vmem %s6, %s291
      %p293 = scmp.eq.s32.totalorder %s23, 0
      // Predicated region
      $region41: #{_forward_impl.1} parent=39 // pred_check
        %p294 = pneg %p293
      $region42: #{_forward_impl.1} parent=39 // pred_check_branch
        %296 = sbr.rel (%p294) target = $region44
      $region43: #{_forward_impl.1} parent=39 // pred_region
        %vm297 = vcmask 7168
        %298 = vst.msk [vmem:[#allocation2] sm:$0xff] %vm297, 0.0
        %299 = vst.msk [vmem:[#allocation2 + $0x8] sm:$0xff] %vm297, 0.0
        %300 = vst.msk [vmem:[#allocation2 + $0x10] sm:$0xff] %vm297, 0.0
        %301 = vst.msk [vmem:[#allocation2 + $0x18] sm:$0xff] %vm297, 0.0
      $region44: #{_forward_impl.1} parent=39 // pred_fallthru
        _
      %v302 = vld [vmem:[%s281] sm:$0xf]
      %v303 = vunpack.c.l.bf16 %v302
      %v304 = vld [vmem:[%s1] sm:$0xff]
      %v305 = vld [vmem:[%s1 + $0x8] sm:$0xff]
      %v306 = vld [vmem:[%s1 + $0x10] sm:$0xff]
      %v307 = vld [vmem:[%s1 + $0x18] sm:$0xff]
      %v308 = vld [vmem:[%s2] sm:$0xff]
      %v309 = vld [vmem:[%s2 + $0x8] sm:$0xff]
      %v310 = vld [vmem:[%s2 + $0x10] sm:$0xff]
      %v311 = vld [vmem:[%s2 + $0x18] sm:$0xff]
      %313 = vset.pattern.permute.xlu0 0
      %314 = vperm.xlu0 %313, %v308
      %v315 = vpop.permute.xlu0 %314
      %318 = vset.pattern.permute.xlu0 0
      %319 = vperm.xlu0 %318, %v309
      %v320 = vpop.permute.xlu0 %319
      %323 = vset.pattern.permute.xlu0 0
      %324 = vperm.xlu0 %323, %v310
      %v325 = vpop.permute.xlu0 %324
      %328 = vset.pattern.permute.xlu0 0
      %329 = vperm.xlu0 %328, %v311
      %v330 = vpop.permute.xlu0 %329
      %333 = vset.pattern.permute.xlu0 0
      %334 = vperm.xlu0 %333, %v304
      %v335 = vpop.permute.xlu0 %334
      %338 = vset.pattern.permute.xlu0 0
      %339 = vperm.xlu0 %338, %v305
      %v340 = vpop.permute.xlu0 %339
      %343 = vset.pattern.permute.xlu0 0
      %344 = vperm.xlu0 %343, %v306
      %v345 = vpop.permute.xlu0 %344
      %348 = vset.pattern.permute.xlu0 0
      %349 = vperm.xlu0 %348, %v307
      %v350 = vpop.permute.xlu0 %349
      %v353 = vperm.slane %v303, 0
      %v354 = vperm.slane %v303, 4
      %v357 = vperm.slane %v353, 0
      %v358 = vperm.slane %v354, 0
      %v359 = vmul.f32 %v335, %v357
      %v360 = vmul.f32 %v335, %v358
      %v361 = vmul.f32 %v340, %v357
      %v362 = vmul.f32 %v340, %v358
      %v363 = vmul.f32 %v345, %v357
      %v364 = vmul.f32 %v345, %v358
      %v365 = vmul.f32 %v350, %v357
      %v366 = vmul.f32 %v350, %v358
      %v367 = vadd.f32 %v315, %v359
      %v368 = vadd.f32 %v315, %v360
      %v369 = vadd.f32 %v320, %v361
      %v370 = vadd.f32 %v320, %v362
      %v371 = vadd.f32 %v325, %v363
      %v372 = vadd.f32 %v325, %v364
      %v373 = vadd.f32 %v330, %v365
      %v374 = vadd.f32 %v330, %v366
      %375 = vset.pattern.permute.xlu0 1
      %376 = vperm.xlu0 %375, %v304
      %v377 = vpop.permute.xlu0 %376
      %379 = vset.pattern.permute.xlu0 1
      %380 = vperm.xlu0 %379, %v305
      %v381 = vpop.permute.xlu0 %380
      %383 = vset.pattern.permute.xlu0 1
      %384 = vperm.xlu0 %383, %v306
      %v385 = vpop.permute.xlu0 %384
      %387 = vset.pattern.permute.xlu0 1
      %388 = vperm.xlu0 %387, %v307
      %v389 = vpop.permute.xlu0 %388
      %v391 = vperm.slane %v303, 1
      %v392 = vperm.slane %v303, 5
      %v395 = vperm.slane %v391, 1
      %v396 = vperm.slane %v392, 1
      %v397 = vmul.f32 %v377, %v395
      %v398 = vmul.f32 %v377, %v396
      %v399 = vmul.f32 %v381, %v395
      %v400 = vmul.f32 %v381, %v396
      %v401 = vmul.f32 %v385, %v395
      %v402 = vmul.f32 %v385, %v396
      %v403 = vmul.f32 %v389, %v395
      %v404 = vmul.f32 %v389, %v396
      %v405 = vadd.f32 %v367, %v397
      %v406 = vadd.f32 %v368, %v398
      %v407 = vadd.f32 %v369, %v399
      %v408 = vadd.f32 %v370, %v400
      %v409 = vadd.f32 %v371, %v401
      %v410 = vadd.f32 %v372, %v402
      %v411 = vadd.f32 %v373, %v403
      %v412 = vadd.f32 %v374, %v404
      %413 = vset.pattern.permute.xlu0 2
      %414 = vperm.xlu0 %413, %v304
      %v415 = vpop.permute.xlu0 %414
      %417 = vset.pattern.permute.xlu0 2
      %418 = vperm.xlu0 %417, %v305
      %v419 = vpop.permute.xlu0 %418
      %421 = vset.pattern.permute.xlu0 2
      %422 = vperm.xlu0 %421, %v306
      %v423 = vpop.permute.xlu0 %422
      %425 = vset.pattern.permute.xlu0 2
      %426 = vperm.xlu0 %425, %v307
      %v427 = vpop.permute.xlu0 %426
      %v429 = vperm.slane %v303, 2
      %v430 = vperm.slane %v303, 6
      %v433 = vperm.slane %v429, 2
      %v434 = vperm.slane %v430, 2
      %v435 = vmul.f32 %v415, %v433
      %v436 = vmul.f32 %v415, %v434
      %v437 = vmul.f32 %v419, %v433
      %v438 = vmul.f32 %v419, %v434
      %v439 = vmul.f32 %v423, %v433
      %v440 = vmul.f32 %v423, %v434
      %v441 = vmul.f32 %v427, %v433
      %v442 = vmul.f32 %v427, %v434
      %v443 = vadd.f32 %v405, %v435
      %v444 = vadd.f32 %v406, %v436
      %v445 = vadd.f32 %v407, %v437
      %v446 = vadd.f32 %v408, %v438
      %v447 = vadd.f32 %v409, %v439
      %v448 = vadd.f32 %v410, %v440
      %v449 = vadd.f32 %v411, %v441
      %v450 = vadd.f32 %v412, %v442
      %v451 = vsub.f32 0.0, %v443
      %v452 = vsub.f32 0.0, %v444
      %v453 = vsub.f32 0.0, %v445
      %v454 = vsub.f32 0.0, %v446
      %v455 = vsub.f32 0.0, %v447
      %v456 = vsub.f32 0.0, %v448
      %v457 = vsub.f32 0.0, %v449
      %v458 = vsub.f32 0.0, %v450
      %v459 = vmul.f32 %v451, 1.442695
      %v460 = vpow.pop %v459
      %v461 = vmul.f32 %v452, 1.442695
      %v462 = vpow.pop %v461
      %v463 = vmul.f32 %v453, 1.442695
      %v464 = vpow.pop %v463
      %v465 = vmul.f32 %v454, 1.442695
      %v466 = vpow.pop %v465
      %v467 = vmul.f32 %v455, 1.442695
      %v468 = vpow.pop %v467
      %v469 = vmul.f32 %v456, 1.442695
      %v470 = vpow.pop %v469
      %v471 = vmul.f32 %v457, 1.442695
      %v472 = vpow.pop %v471
      %v473 = vmul.f32 %v458, 1.442695
      %v474 = vpow.pop %v473
      %v475 = vadd.f32 %v460, 1.0
      %v476 = vadd.f32 %v462, 1.0
      %v477 = vadd.f32 %v464, 1.0
      %v478 = vadd.f32 %v466, 1.0
      %v479 = vadd.f32 %v468, 1.0
      %v480 = vadd.f32 %v470, 1.0
      %v481 = vadd.f32 %v472, 1.0
      %v482 = vadd.f32 %v474, 1.0
      %v483 = vrcp.pop %v475
      %v484 = vrcp.pop %v476
      %v485 = vrcp.pop %v477
      %v486 = vrcp.pop %v478
      %v487 = vrcp.pop %v479
      %v488 = vrcp.pop %v480
      %v489 = vrcp.pop %v481
      %v490 = vrcp.pop %v482
      %v491 = vmul.f32 %v443, %v483
      %v492 = vmul.f32 %v444, %v484
      %v493 = vmul.f32 %v445, %v485
      %v494 = vmul.f32 %v446, %v486
      %v495 = vmul.f32 %v447, %v487
      %v496 = vmul.f32 %v448, %v488
      %v497 = vmul.f32 %v449, %v489
      %v498 = vmul.f32 %v450, %v490
      %v499 = vld [vmem:[#allocation2] sm:$0xff]
      %v500 = vld [vmem:[#allocation2 + $0x8] sm:$0xff]
      %v501 = vld [vmem:[#allocation2 + $0x10] sm:$0xff]
      %v502 = vld [vmem:[#allocation2 + $0x18] sm:$0xff]
      %v503 = vadd.f32 %v491, %v492
      %504 = vadd.xlane.f32.xlu0 %v503
      %v505 = vpop.xlane.xlu0 %504
      %v506 = vadd.f32 %v493, %v494
      %507 = vadd.xlane.f32.xlu0 %v506
      %v508 = vpop.xlane.xlu0 %507
      %v509 = vadd.f32 %v495, %v496
      %510 = vadd.xlane.f32.xlu0 %v509
      %v511 = vpop.xlane.xlu0 %510
      %v512 = vadd.f32 %v497, %v498
      %513 = vadd.xlane.f32.xlu0 %v512
      %v514 = vpop.xlane.xlu0 %513
      %v515 = vadd.f32 %v499, %v505
      %v516 = vadd.f32 %v500, %v508
      %v517 = vadd.f32 %v501, %v511
      %v518 = vadd.f32 %v502, %v514
      %vm519 = vcmask 7168
      %520 = vst.msk [vmem:[#allocation2] sm:$0xff] %vm519, %v515
      %521 = vst.msk [vmem:[#allocation2 + $0x8] sm:$0xff] %vm519, %v516
      %522 = vst.msk [vmem:[#allocation2 + $0x10] sm:$0xff] %vm519, %v517
      %523 = vst.msk [vmem:[#allocation2 + $0x18] sm:$0xff] %vm519, %v518
      %p524 = scmp.eq.s32.totalorder %s23, 2
      // Predicated region
      $region45: #{_forward_impl.1} parent=39 // pred_check
        %p525 = pneg %p524
      $region46: #{_forward_impl.1} parent=39 // pred_check_branch
        %527 = sbr.rel (%p525) target = $region48
      $region47: #{_forward_impl.1} parent=39 // pred_region
        %v528 = vld [vmem:[#allocation2] sm:$0xff]
        %v529 = vld [vmem:[#allocation2 + $0x8] sm:$0xff]
        %v530 = vld [vmem:[#allocation2 + $0x10] sm:$0xff]
        %v531 = vld [vmem:[#allocation2 + $0x18] sm:$0xff]
        %v532 = vsub.f32 0.0, %v308
        %v533 = vsub.f32 0.0, %v309
        %v534 = vsub.f32 0.0, %v310
        %v535 = vsub.f32 0.0, %v311
        %v536 = vmul.f32 %v532, 1.442695
        %v537 = vpow.pop %v536
        %v538 = vmul.f32 %v533, 1.442695
        %v539 = vpow.pop %v538
        %v540 = vmul.f32 %v534, 1.442695
        %v541 = vpow.pop %v540
        %v542 = vmul.f32 %v535, 1.442695
        %v543 = vpow.pop %v542
        %v544 = vadd.f32 %v537, 1.0
        %v545 = vadd.f32 %v539, 1.0
        %v546 = vadd.f32 %v541, 1.0
        %v547 = vadd.f32 %v543, 1.0
        %v548 = vrcp.pop %v544
        %v549 = vrcp.pop %v545
        %v550 = vrcp.pop %v546
        %v551 = vrcp.pop %v547
        %v552 = vmul.f32 %v308, %v548
        %v553 = vmul.f32 %v309, %v549
        %v554 = vmul.f32 %v310, %v550
        %v555 = vmul.f32 %v311, %v551
        %v556 = vmul.f32 %v552, 92.0
        %v557 = vmul.f32 %v553, 92.0
        %v558 = vmul.f32 %v554, 92.0
        %v559 = vmul.f32 %v555, 92.0
        %v560 = vsub.f32 %v528, %v556
        %v561 = vsub.f32 %v529, %v557
        %v562 = vsub.f32 %v530, %v558
        %v563 = vsub.f32 %v531, %v559
        %v564 = vmul.f32 %v560, 0.00147929
        %v565 = vmul.f32 %v561, 0.00147929
        %v566 = vmul.f32 %v562, 0.00147929
        %v567 = vmul.f32 %v563, 0.00147929
        %568 = vst.msk [vmem:[%s287] sm:$0xff] %vm519, %v564
        %569 = vst.msk [vmem:[%s287 + $0x8] sm:$0xff] %vm519, %v565
        %570 = vst.msk [vmem:[%s287 + $0x10] sm:$0xff] %vm519, %v566
        %571 = vst.msk [vmem:[%s287 + $0x18] sm:$0xff] %vm519, %v567
        %v572 = vld [vmem:[%s3] sm:$0xff]
        %v573 = vld [vmem:[%s3 + $0x8] sm:$0xff]
        %v574 = vld [vmem:[%s3 + $0x10] sm:$0xff]
        %v575 = vld [vmem:[%s3 + $0x18] sm:$0xff]
        %v576 = vld [vmem:[%s3 + $0x20] sm:$0xff]
        %v577 = vld [vmem:[%s3 + $0x28] sm:$0xff]
        %v578 = vld [vmem:[%s3 + $0x30] sm:$0xff]
        %v579 = vld [vmem:[%s3 + $0x38] sm:$0xff]
        %v580 = vld [vmem:[%s3 + $0x40] sm:$0xff]
        %v581 = vld [vmem:[%s3 + $0x48] sm:$0xff]
        %v582 = vld [vmem:[%s3 + $0x50] sm:$0xff]
        %v583 = vld [vmem:[%s3 + $0x58] sm:$0xff]
        %v584 = vld [vmem:[%s3 + $0x60] sm:$0xff]
        %v585 = vld [vmem:[%s3 + $0x68] sm:$0xff]
        %v586 = vld [vmem:[%s3 + $0x70] sm:$0xff]
        %v587 = vld [vmem:[%s3 + $0x78] sm:$0xff]
        %v588 = vld [vmem:[%s4] sm:$0xff]
        %v589 = vld [vmem:[%s4 + $0x8] sm:$0xff]
        %v590 = vld [vmem:[%s4 + $0x10] sm:$0xff]
        %v591 = vld [vmem:[%s4 + $0x18] sm:$0xff]
        %v592 = vld [vmem:[%s4 + $0x20] sm:$0xff]
        %v593 = vld [vmem:[%s4 + $0x28] sm:$0xff]
        %v594 = vld [vmem:[%s4 + $0x30] sm:$0xff]
        %v595 = vld [vmem:[%s4 + $0x38] sm:$0xff]
        %v596 = vld [vmem:[%s4 + $0x40] sm:$0xff]
        %v597 = vld [vmem:[%s4 + $0x48] sm:$0xff]
        %v598 = vld [vmem:[%s4 + $0x50] sm:$0xff]
        %v599 = vld [vmem:[%s4 + $0x58] sm:$0xff]
        %v600 = vld [vmem:[%s4 + $0x60] sm:$0xff]
        %v601 = vld [vmem:[%s4 + $0x68] sm:$0xff]
        %v602 = vld [vmem:[%s4 + $0x70] sm:$0xff]
        %v603 = vld [vmem:[%s4 + $0x78] sm:$0xff]
        %vm604 = vcmask 261120
        %v606 = vsel %vm604, %v572, 0
        %v609 = vsel %vm604, %v573, 0
        %v612 = vsel %vm604, %v574, 0
        %v615 = vsel %vm604, %v575, 0
        %v618 = vsel %vm604, %v576, 0
        %v621 = vsel %vm604, %v577, 0
        %v624 = vsel %vm604, %v578, 0
        %v627 = vsel %vm604, %v579, 0
        %v630 = vsel %vm604, %v580, 0
        %v633 = vsel %vm604, %v581, 0
        %v636 = vsel %vm604, %v582, 0
        %v639 = vsel %vm604, %v583, 0
        %v642 = vsel %vm604, %v584, 0
        %v645 = vsel %vm604, %v585, 0
        %v648 = vsel %vm604, %v586, 0
        %v651 = vsel %vm604, %v587, 0
        %653 = vmatpush.msra.mxu0 0.0
        %654 = vmatpush.msra.mxu0 0.0
        %655 = vmatpush.msra.mxu0 0.0
        %656 = vmatpush.msra.mxu0 0.0
        %657 = vmatpush.msra.mxu0 0.0
        %658 = vmatpush.msra.mxu0 0.0
        %659 = vmatpush.msra.mxu0 0.0
        %660 = vmatpush.msra.mxu0 0.0
        %661 = vmatpush.msra.mxu0 0.0
        %662 = vmatpush.msra.mxu0 0.0
        %663 = vmatpush.msra.mxu0 0.0
        %664 = vmatpush.msra.mxu0 0.0
        %665 = vmatpush.msra.mxu0 %v567
        %666 = vmatpush.msra.mxu0 %v566
        %667 = vmatpush.msra.mxu0 %v565
        %668 = vmatpush.msra.mxu0 %v564
        %669 = vmatmul.f32.gmra.mxu0 %v606
        %v670 = vpop.f32.mrf.mxu0
        %v671 = vadd.f32 %v588, %v670
        %672 = vmatmul.f32.gmra.mxu0 %v609
        %v673 = vpop.f32.mrf.mxu0
        %v674 = vadd.f32 %v589, %v673
        %675 = vmatmul.f32.gmra.mxu0 %v612
        %v676 = vpop.f32.mrf.mxu0
        %v677 = vadd.f32 %v590, %v676
        %678 = vmatmul.f32.gmra.mxu0 %v615
        %v679 = vpop.f32.mrf.mxu0
        %v680 = vadd.f32 %v591, %v679
        %681 = vmatmul.f32.gmra.mxu0 %v618
        %v682 = vpop.f32.mrf.mxu0
        %v683 = vadd.f32 %v592, %v682
        %684 = vmatmul.f32.gmra.mxu0 %v621
        %v685 = vpop.f32.mrf.mxu0
        %v686 = vadd.f32 %v593, %v685
        %687 = vmatmul.f32.gmra.mxu0 %v624
        %v688 = vpop.f32.mrf.mxu0
        %v689 = vadd.f32 %v594, %v688
        %690 = vmatmul.f32.gmra.mxu0 %v627
        %v691 = vpop.f32.mrf.mxu0
        %v692 = vadd.f32 %v595, %v691
        %693 = vmatmul.f32.gmra.mxu0 %v630
        %v694 = vpop.f32.mrf.mxu0
        %v695 = vadd.f32 %v596, %v694
        %696 = vmatmul.f32.gmra.mxu0 %v633
        %v697 = vpop.f32.mrf.mxu0
        %v698 = vadd.f32 %v597, %v697
        %699 = vmatmul.f32.gmra.mxu0 %v636
        %v700 = vpop.f32.mrf.mxu0
        %v701 = vadd.f32 %v598, %v700
        %702 = vmatmul.f32.gmra.mxu0 %v639
        %v703 = vpop.f32.mrf.mxu0
        %v704 = vadd.f32 %v599, %v703
        %705 = vmatmul.f32.gmra.mxu0 %v642
        %v706 = vpop.f32.mrf.mxu0
        %v707 = vadd.f32 %v600, %v706
        %708 = vmatmul.f32.gmra.mxu0 %v645
        %v709 = vpop.f32.mrf.mxu0
        %v710 = vadd.f32 %v601, %v709
        %711 = vmatmul.f32.gmra.mxu0 %v648
        %v712 = vpop.f32.mrf.mxu0
        %v713 = vadd.f32 %v602, %v712
        %714 = vmatmul.f32.gmra.mxu0 %v651
        %v715 = vpop.f32.mrf.mxu0
        %v716 = vadd.f32 %v603, %v715
        %717 = vdwg.mxu0
        %718 = vst.msk [vmem:[%s292] sm:$0xff] %vm519, %v671
        %719 = vst.msk [vmem:[%s292 + $0x8] sm:$0xff] %vm519, %v674
        %720 = vst.msk [vmem:[%s292 + $0x10] sm:$0xff] %vm519, %v677
        %721 = vst.msk [vmem:[%s292 + $0x18] sm:$0xff] %vm519, %v680
        %722 = vst.msk [vmem:[%s292 + $0x20] sm:$0xff] %vm519, %v683
        %723 = vst.msk [vmem:[%s292 + $0x28] sm:$0xff] %vm519, %v686
        %724 = vst.msk [vmem:[%s292 + $0x30] sm:$0xff] %vm519, %v689
        %725 = vst.msk [vmem:[%s292 + $0x38] sm:$0xff] %vm519, %v692
        %726 = vst.msk [vmem:[%s292 + $0x40] sm:$0xff] %vm519, %v695
        %727 = vst.msk [vmem:[%s292 + $0x48] sm:$0xff] %vm519, %v698
        %728 = vst.msk [vmem:[%s292 + $0x50] sm:$0xff] %vm519, %v701
        %729 = vst.msk [vmem:[%s292 + $0x58] sm:$0xff] %vm519, %v704
        %730 = vst.msk [vmem:[%s292 + $0x60] sm:$0xff] %vm519, %v707
        %731 = vst.msk [vmem:[%s292 + $0x68] sm:$0xff] %vm519, %v710
        %732 = vst.msk [vmem:[%s292 + $0x70] sm:$0xff] %vm519, %v713
        %733 = vst.msk [vmem:[%s292 + $0x78] sm:$0xff] %vm519, %v716
      $region48: #{_forward_impl.1} parent=39 // pred_fallthru
        _
      %p734 = scmp.lt.s32.totalorder %s22, 1
      %s735 = scalar_select %p734, %s22, 1
      %s736 = smul.addr %s735, 4
      %s737 = smul.addr %s736, 8
      %s738 = scalar_lea.vmem %s5, %s737
      %p739 = scmp.lt.s32.totalorder %s22, 1
      %s740 = scalar_select %p739, %s22, 1
      %s741 = smul.addr %s740, 16
      %s742 = smul.addr %s741, 8
      %s743 = scalar_lea.vmem %s6, %s742
      // Predicated region
      $region49: #{_forward_impl.1} parent=39 // pred_check
        %p744 = pneg %p160
      $region50: #{_forward_impl.1} parent=39 // pred_check_branch
        %746 = sbr.rel (%p744) target = $region52
      $region51: #{_forward_impl.1} parent=39 // pred_region
        _
      $region52: #{_forward_impl.1} parent=39 // pred_fallthru
        _
      // Predicated region
      $region53: #{_forward_impl.1} parent=39 // pred_check
        %p747 = pneg %p186
      $region54: #{_forward_impl.1} parent=39 // pred_check_branch
        %749 = sbr.rel (%p747) target = $region56
      $region55: #{_forward_impl.1} parent=39 // pred_region
        _
      $region56: #{_forward_impl.1} parent=39 // pred_fallthru
        _
    $region40: #{_forward_impl.1} parent=5 // pred_fallthru
      _
    %p750 = scmp.le.s32.totalorder 2, %s13
    // Predicated region
    $region57: #{_forward_impl.1} parent=5 // pred_check
      %p751 = pneg %p750
    $region58: #{_forward_impl.1} parent=5 // pred_check_branch
      %753 = sbr.rel (%p751) target = $region60
    $region59: #{_forward_impl.1} parent=5 // pred_region
      %s754 = ssub.s32 %s13, 2
      // Predicated region
      $region61: #{_forward_impl.1} parent=59 // pred_check
        %p755 = pneg %p166
      $region62: #{_forward_impl.1} parent=59 // pred_check_branch
        %757 = sbr.rel (%p755) target = $region64
      $region63: #{_forward_impl.1} parent=59 // pred_region
        %p758 = scmp.lt.s32.totalorder %s24, 1
        %s759 = scalar_select %p758, %s24, 1
        %s760 = smul.addr %s759, 4
        %s761 = smul.addr %s760, 8
        %s762 = scalar_lea.vmem %s5, %s761
      $region64: #{_forward_impl.1} parent=59 // pred_fallthru
        _
      // Predicated region
      $region65: #{_forward_impl.1} parent=59 // pred_check
        %p763 = pneg %p192
      $region66: #{_forward_impl.1} parent=59 // pred_check_branch
        %765 = sbr.rel (%p763) target = $region68
      $region67: #{_forward_impl.1} parent=59 // pred_region
        %p766 = scmp.lt.s32.totalorder %s24, 1
        %s767 = scalar_select %p766, %s24, 1
        %s768 = smul.addr %s767, 16
        %s769 = smul.addr %s768, 8
        %s770 = scalar_lea.vmem %s6, %s769
      $region68: #{_forward_impl.1} parent=59 // pred_fallthru
        _
    $region60: #{_forward_impl.1} parent=5 // pred_fallthru
      _
  $region6: #{_forward_impl.1} parent=0 // loop_footer
    %s17 = sadd.s32 1, %s13
  $region7: #{_forward_impl.1} parent=0 // loop_footer_branch
    %12 = sbr.rel target = $region3
  $region8: #{_forward_impl.1} parent=0 // loop_exit
    _

</llo_original>
